<compile_context>
chip_gen: v7x
topology: tpu7x:2x2x1
jax: 0.10.0
libtpu: 0.0.40
codegen_flags: <defaults>
</compile_context>

<pallas_src>
import functools

import jax
import jax.numpy as jnp
from jax.experimental import pallas as pl
from jax.experimental.pallas import tpu as pltpu


def _nll_kernel(pred_ref, tgt_ref, out_ref, acc_ref, *,
                steps_per_core, num_tiles, inv_n):
    core = pl.program_id(0)
    step = pl.program_id(1)
    block_idx = core * steps_per_core + step

    @pl.when(step == 0)
    def _init():
        acc_ref[...] = jnp.zeros_like(acc_ref)

    # Clamped overhang tiles (when num_tiles % cores != 0) skip compute entirely.
    @pl.when(block_idx < num_tiles)
    def _accumulate():
        pred = pred_ref[...]                          # keep HBM dtype (bf16 stays bf16)
        tgt = tgt_ref[...].astype(jnp.int32)          # (tn, 1) column; padded rows hold -1
        nc = pred.shape[1]
        class_ids = jax.lax.broadcasted_iota(jnp.int32, (1, nc), 1)
        mask = class_ids == tgt                       # (tn, nc) via lane/sublane broadcast
        picked = jnp.where(mask, pred, jnp.zeros((), pred.dtype)).astype(jnp.float32)
        acc_ref[...] += jnp.sum(picked, axis=0, keepdims=True)   # (1, C) partial sums

    @pl.when(step == steps_per_core - 1)
    def _finalize():
        partial = -jnp.sum(acc_ref[...]) * inv_n      # this core's  -sum / N
        out_ref[...] = jnp.zeros((8, 128), jnp.float32) + partial


def _default_num_cores():
    # 2-way "parallel" split only pays off on chips with >1 TensorCore per JAX device
    # (v4 / v5p megacore, v7x). On single-TC chips (v5e, v6e) it would just serialize.
    try:
        kind = jax.devices()[0].device_kind.lower()
    except Exception:
        return 1
    if any(tag in kind for tag in ("v4", "v5p", "v7", "7x")):
        return 2
    return 1


def combined_loss(pred, target, trans_feat=None, *, tile_n=None, num_cores=None):
    """Pallas TPU implementation of CombinedLoss.forward == F.nll_loss(pred, target)."""
    del trans_feat  # unused by the reference module's forward
    n, c = pred.shape
    pred_item = jnp.dtype(pred.dtype).itemsize

    # Small target dtype: the (tn, 1) block lane-pads to a (tn, 128) VMEM slab, so int8
    # (C < 128) costs 4x less VMEM than int32 and frees room for bigger pred tiles.
    if c <= 127:
        tgt_dtype = jnp.int8
    elif c <= 32767:
        tgt_dtype = jnp.int16
    else:
        tgt_dtype = jnp.int32
    tgt_item = jnp.dtype(tgt_dtype).itemsize

    if num_cores is None:
        num_cores = _default_num_cores()

    # Tile rows: big enough to amortize the ~0.35us per-step pipeline overhead, small enough
    # that double-buffered, lane-padded blocks stay inside the 16 MiB default scoped VMEM on
    # every generation (v5e 16 / v6e 32 / v7x 32 MiB defaults).
    if tile_n is None:
        vmem_budget = 10 * 1024 * 1024
        lanes = max(128, ((c + 127) // 128) * 128)
        per_row = 2 * lanes * (pred_item + tgt_item)      # x2 for double buffering
        tile_n = max(64, min(16384, (vmem_budget // per_row) // 8 * 8))
    tn = min(int(tile_n), ((n + 7) // 8) * 8)
    tn = max(8, (tn // 8) * 8)

    num_tiles = pl.cdiv(n, tn)
    cores = max(1, min(int(num_cores), num_tiles))
    steps = pl.cdiv(num_tiles, cores)
    inv_n = 1.0 / float(n)

    # Fold row-validity into the target: pad with -1 so overhang rows of the last tile never
    # match any class id. This removes the per-tile row mask from the kernel's inner loop.
    padded_rows = num_tiles * tn
    tgt = target.astype(tgt_dtype)
    if padded_rows != n:
        tgt = jnp.pad(tgt, (0, padded_rows - n), constant_values=-1)
    tgt2d = tgt.reshape(padded_rows, 1)

    def tile_map(core, step):
        # Overhanging (core, step) pairs re-read the last tile; the in-kernel pl.when guard
        # skips their compute so nothing is double counted.
        return (jnp.minimum(core * steps + step, num_tiles - 1), 0)

    kernel = functools.partial(
        _nll_kernel, steps_per_core=steps, num_tiles=num_tiles, inv_n=inv_n)

    cost = pl.CostEstimate(
        flops=2 * n * c,
        transcendentals=0,
        bytes_accessed=n * c * pred_item + padded_rows * tgt_item + cores * 8 * 128 * 4)

    out = pl.pallas_call(
        kernel,
        out_shape=jax.ShapeDtypeStruct((cores * 8, 128), jnp.float32),
        grid_spec=pltpu.PrefetchScalarGridSpec(
            num_scalar_prefetch=0,
            grid=(cores, steps),
            in_specs=[
                pl.BlockSpec((tn, c), tile_map),
                pl.BlockSpec((tn, 1), tile_map),
            ],
            out_specs=pl.BlockSpec((8, 128), lambda core, step: (core, 0)),
            scratch_shapes=[pltpu.VMEM((1, c), jnp.float32)],
        ),
        compiler_params=pltpu.CompilerParams(
            dimension_semantics=("parallel", "arbitrary")),
        cost_estimate=cost,
    )(pred, tgt2d)

    # one per-core partial (-sum_core / N) per (8,128) block; add them (tiny XLA op).
    return jnp.sum(out[0::8, 0])


def _ref_nll(pred, target):
    p = pred.astype(jnp.float32)
    n = p.shape[0]
    return -jnp.mean(p[jnp.arange(n), target])


if __name__ == "__main__":
    key = jax.random.PRNGKey(0)
    k1, k2, k3, k4, k5, k6 = jax.random.split(key, 6)

    # case 1: toy shapes of the original module (single tile, auto cores/tile)
    N1, C1 = 8, 16
    pred1 = jax.nn.log_softmax(jax.random.normal(k1, (N1, C1), jnp.float32), axis=-1)
    tgt1 = jax.random.randint(k2, (N1,), 0, C1, dtype=jnp.int32)
    trans_feat = jax.random.normal(k1, (N1, 64, 64), jnp.float32)  # unused by forward
    loss1 = jax.block_until_ready(combined_loss(pred1, tgt1, trans_feat))
    ref1 = _ref_nll(pred1, tgt1)
    assert jnp.allclose(loss1, ref1, atol=1e-6, rtol=1e-6), (loss1, ref1)

    # case 2: tiled reduction, forced 2-core split, partial last tile + target padding (f32)
    N2, C2 = 1000, 40
    pred2 = jax.nn.log_softmax(jax.random.normal(k3, (N2, C2), jnp.float32), axis=-1)
    tgt2 = jax.random.randint(k4, (N2,), 0, C2, dtype=jnp.int32)
    loss2 = jax.block_until_ready(combined_loss(pred2, tgt2, None, tile_n=128, num_cores=2))
    ref2 = _ref_nll(pred2, tgt2)
    assert jnp.allclose(loss2, ref2, atol=1e-5, rtol=1e-5), (loss2, ref2)

    # case 2b: same data, auto tile / auto cores (exercises the VMEM-budget tile derivation)
    loss2b = jax.block_until_ready(combined_loss(pred2, tgt2, None))
    assert jnp.allclose(loss2b, ref2, atol=1e-5, rtol=1e-5), (loss2b, ref2)

    # case 3: bf16 pred stays bf16 in HBM and VMEM; select in bf16, accumulate in f32
    N3, C3 = 256, 40
    pred3 = jax.nn.log_softmax(
        jax.random.normal(k5, (N3, C3), jnp.float32), axis=-1).astype(jnp.bfloat16)
    tgt3 = jax.random.randint(k6, (N3,), 0, C3, dtype=jnp.int32)
    loss3 = jax.block_until_ready(combined_loss(pred3, tgt3, None, tile_n=64, num_cores=1))
    ref3 = _ref_nll(pred3, tgt3)
    assert jnp.allclose(loss3, ref3, atol=1e-4, rtol=1e-4), (loss3, ref3)

    print("KERNEL_OK")
</pallas_src>

<mosaic_0001>
module attributes {stable_mosaic.version = 11 : i64} {
  func.func @_nll_kernel(%arg0: i32, %arg1: i32, %arg2: memref<8x16xf32, #tpu.memory_space<vmem>>, %arg3: memref<8x1xi8, #tpu.memory_space<vmem>>, %arg4: memref<8x128xf32, #tpu.memory_space<vmem>>, %arg5: memref<1x16xf32, #tpu.memory_space<vmem>>) attributes {dimension_semantics = [#tpu.dimension_semantics<parallel>, #tpu.dimension_semantics<arbitrary>], iteration_bounds = array<i64: 1, 1>, scalar_prefetch = 0 : i64, scratch_operands = 1 : i64, tpu.core_type = #tpu.core_type<tc>, window_params = [{transform_indices = @transform_0, window_bounds = array<i64: 8, 16>}, {transform_indices = @transform_1, window_bounds = array<i64: 8, 1>}, {transform_indices = @transform_2, window_bounds = array<i64: 8, 128>}]} {
    %c1_i32 = arith.constant 1 : i32
    %0 = arith.muli %arg0, %c1_i32 : i32
    %1 = arith.addi %0, %arg1 : i32
    %c0_i32 = arith.constant 0 : i32
    %2 = arith.cmpi eq, %arg1, %c0_i32 : i32
    %3 = arith.extui %2 : i1 to i32
    %c0_i32_0 = arith.constant 0 : i32
    %4 = arith.cmpi ne, %3, %c0_i32_0 : i32
    scf.if %4 {
      %cst = arith.constant 0.000000e+00 : f32
      %11 = vector.broadcast %cst : f32 to vector<1x16xf32>
      %c0 = arith.constant 0 : index
      %c0_5 = arith.constant 0 : index
      %12 = vector.load %arg5[%c0, %c0_5] : memref<1x16xf32, #tpu.memory_space<vmem>>, vector<1x16xf32>
      tpu.vector_store %arg5[%c0, %c0_5], %11 {strides = array<i32>} : memref<1x16xf32, #tpu.memory_space<vmem>>, vector<1x16xf32>,
    } else {
    }
    %c1_i32_1 = arith.constant 1 : i32
    %5 = arith.cmpi slt, %1, %c1_i32_1 : i32
    %6 = arith.extui %5 : i1 to i32
    %c0_i32_2 = arith.constant 0 : i32
    %7 = arith.cmpi ne, %6, %c0_i32_2 : i32
    scf.if %7 {
      %c0 = arith.constant 0 : index
      %c0_5 = arith.constant 0 : index
      %11 = vector.load %arg2[%c0, %c0_5] : memref<8x16xf32, #tpu.memory_space<vmem>>, vector<8x16xf32>
      %c0_6 = arith.constant 0 : index
      %c0_7 = arith.constant 0 : index
      %12 = vector.load %arg3[%c0_6, %c0_7] : memref<8x1xi8, #tpu.memory_space<vmem>>, vector<8x1xi8>
      %13 = arith.extsi %12 : vector<8x1xi8> to vector<8x1xi32>
      %14 = tpu.iota {dimensions = array<i32: 1>} : vector<1x16xi32>
      %15 = vector.broadcast %14 : vector<1x16xi32> to vector<8x16xi32>
      %16 = vector.broadcast %13 : vector<8x1xi32> to vector<8x16xi32>
      %17 = arith.cmpi eq, %15, %16 : vector<8x16xi32>
      %cst = arith.constant 0.000000e+00 : f32
      %18 = vector.broadcast %cst : f32 to vector<8x16xf32>
      %19 = arith.select %17, %11, %18 : vector<8x16xi1>, vector<8x16xf32>
      %c0_8 = arith.constant 0 : index
      %c0_9 = arith.constant 0 : index
      %20 = vector.load %arg5[%c0_8, %c0_9] : memref<1x16xf32, #tpu.memory_space<vmem>>, vector<1x16xf32>
      %cst_10 = arith.constant dense<0.000000e+00> : vector<16xf32>
      %21 = vector.multi_reduction <add>, %19, %cst_10 [0] : vector<8x16xf32> to vector<16xf32>
      %22 = vector.shape_cast %21 : vector<16xf32> to vector<1x16xf32>
      %23 = arith.addf %20, %22 : vector<1x16xf32>
      %c0_11 = arith.constant 0 : index
      %c0_12 = arith.constant 0 : index
      %24 = vector.load %arg5[%c0_11, %c0_12] : memref<1x16xf32, #tpu.memory_space<vmem>>, vector<1x16xf32>
      tpu.vector_store %arg5[%c0_11, %c0_12], %23 {strides = array<i32>} : memref<1x16xf32, #tpu.memory_space<vmem>>, vector<1x16xf32>,
    } else {
    }
    %c0_i32_3 = arith.constant 0 : i32
    %8 = arith.cmpi eq, %arg1, %c0_i32_3 : i32
    %9 = arith.extui %8 : i1 to i32
    %c0_i32_4 = arith.constant 0 : i32
    %10 = arith.cmpi ne, %9, %c0_i32_4 : i32
    scf.if %10 {
      %c0 = arith.constant 0 : index
      %c0_5 = arith.constant 0 : index
      %11 = vector.load %arg5[%c0, %c0_5] : memref<1x16xf32, #tpu.memory_space<vmem>>, vector<1x16xf32>
      %12 = vector.shape_cast %11 : vector<1x16xf32> to vector<1x1x16xf32>
      %cst = arith.constant dense<0.000000e+00> : vector<1xf32>
      %13 = vector.multi_reduction <add>, %12, %cst [1, 2] : vector<1x1x16xf32> to vector<1xf32>
      %14 = vector.shape_cast %13 : vector<1xf32> to vector<1x1x1xf32>
      %15 = vector.extract %14[0, 0, 0] : f32 from vector<1x1x1xf32>
      %cst_6 = arith.constant 0.000000e+00 : f32
      %16 = arith.subf %cst_6, %15 : f32
      %cst_7 = arith.constant 1.250000e-01 : f32
      %17 = arith.mulf %16, %cst_7 : f32
      %cst_8 = arith.constant 0.000000e+00 : f32
      %18 = vector.broadcast %cst_8 : f32 to vector<8x128xf32>
      %19 = vector.broadcast %17 : f32 to vector<8x128xf32>
      %20 = arith.addf %18, %19 : vector<8x128xf32>
      %c0_9 = arith.constant 0 : index
      %c0_10 = arith.constant 0 : index
      %21 = vector.load %arg4[%c0_9, %c0_10] : memref<8x128xf32, #tpu.memory_space<vmem>>, vector<8x128xf32>
      tpu.vector_store %arg4[%c0_9, %c0_10], %20 {strides = array<i32>} : memref<8x128xf32, #tpu.memory_space<vmem>>, vector<8x128xf32>,
    } else {
    }
    return
  }
  func.func @transform_0(%arg0: i32, %arg1: i32) -> (i32, i32) {
    %c1_i32 = arith.constant 1 : i32
    %0 = arith.muli %arg0, %c1_i32 : i32
    %1 = arith.addi %0, %arg1 : i32
    %c0_i32 = arith.constant 0 : i32
    %2 = arith.minsi %1, %c0_i32 : i32
    %c0_i32_0 = arith.constant 0 : i32
    %c0_i32_1 = arith.constant 0 : i32
    return %2, %c0_i32_0 : i32, i32
  }
  func.func @transform_1(%arg0: i32, %arg1: i32) -> (i32, i32) {
    %c1_i32 = arith.constant 1 : i32
    %0 = arith.muli %arg0, %c1_i32 : i32
    %1 = arith.addi %0, %arg1 : i32
    %c0_i32 = arith.constant 0 : i32
    %2 = arith.minsi %1, %c0_i32 : i32
    %c0_i32_0 = arith.constant 0 : i32
    %c0_i32_1 = arith.constant 0 : i32
    return %2, %c0_i32_0 : i32, i32
  }
  func.func @transform_2(%arg0: i32, %arg1: i32) -> (i32, i32) {
    %c0_i32 = arith.constant 0 : i32
    %c0_i32_0 = arith.constant 0 : i32
    return %arg0, %c0_i32 : i32, i32
  }
}

</mosaic_0001>

<llo_original>
// kernel: tpu_custom_call.1
$region0: #{tpu_custom_call.1}
  #allocation0 [shape = 'u32[]', space=smem, size = 0x4, offset = 0x4, fixed_abs, tag = 'smem constant byte address 0x4 - core index']
  #allocation1 [shape = 'u32[144,128]{1,0:T(1,128)}', space=vmem, size = 0x12000, scoped, tag = 'internal scratch']
  #allocation2 [shape = 'f32[1,16]{1,0:T(1,128)}', space=vmem, size = 0x200, scoped, tag = 'scratch operand']
  %s0 = inlined_call_operand.hbm [shape: f32[8,16], index: 0, kind: input, shape index: {}]
  %s1 = inlined_call_operand.vmem [shape: s8[8,1], index: 1, kind: input, shape index: {}]
  %s2 = inlined_call_operand.hbm [shape: f32[8,128], index: 2, kind: output, shape index: {}]
  %s3 = sld [smem:[#allocation0]]
  $region34: #{tpu_custom_call.1} parent=0
    _
  %s5 = ssub.s32 1, %s3
  %s6 = scalar_select 0, %s5, %s3
  $region1: #{tpu_custom_call.1} parent=0
    #allocation3 [shape = 'u8[4096]{0}', space=vmem, size = 0x1000, scoped, tag = 'input window, operand 0, single buffered']
    #allocation4 [shape = 's32[1]{0}', space=sflag, size = 0x4, scoped, tag = 'scoped memory for tpu_custom_call.1']
    #allocation5 [shape = 's32[1]{0}', space=sflag, size = 0x4, scoped, tag = 'scoped memory for tpu_custom_call.1']
    #allocation6 [shape = 'u8[4096]{0}', space=vmem, size = 0x1000, scoped, tag = 'output window, operand 0, single buffered']
    %7 = vsyncpa [#allocation4], 0
    %8 = vsyncpa [#allocation5], 0
    // Predicated region
    $region2: #{tpu_custom_call.1} parent=1 // pred_check
      _
    $region3: #{tpu_custom_call.1} parent=1 // pred_check_branch
      %10 = sbr.rel (0) target = $region5
    $region4: #{tpu_custom_call.1} parent=1 // pred_region
      %s11 = sadd.s32 0, 0
      %p12 = scmp.lt.s32.totalorder %s11, 0
      %s13 = scalar_select %p12, %s11, 0
      %s15 = ssub.s32 128, 128
      %16 = vsyncadd [#allocation4], %s15
      %s17 = smul.addr %s13, 128
      %s18 = scalar_lea.hbm %s0, %s17
      %s20 = sshll.u32 [#allocation3], 4
      %s21 = int_to_ptr.vmem [resolvable:$true] %s20
      %23 = dma.hbm_to_vmem [thread:$0]  %s18, 128, %s21, [#allocation4]
    $region5: #{tpu_custom_call.1} parent=1 // pred_fallthru
      _
    // Predicated region
    $region6: #{tpu_custom_call.1} parent=1 // pred_check
      _
    $region7: #{tpu_custom_call.1} parent=1 // pred_check_branch
      %25 = sbr.rel (0) target = $region9
    $region8: #{tpu_custom_call.1} parent=1 // pred_region
      %s26 = sadd.s32 0, 0
      %p27 = scmp.lt.s32.totalorder %s26, 0
      %s28 = scalar_select %p27, %s26, 0
      %p29 = scmp.lt.s32.totalorder %s28, 0
      %s30 = scalar_select %p29, %s28, 0
      %s31 = smul.addr %s30, 2
      %s32 = scalar_lea.vmem %s1, %s31
      %s33 = sadd.s32 0, 0
      %p34 = scmp.lt.s32.totalorder %s33, 0
      %s35 = scalar_select %p34, %s33, 0
    $region9: #{tpu_custom_call.1} parent=1 // pred_fallthru
      _
    // Predicated region
    $region10: #{tpu_custom_call.1} parent=1 // pred_check
      _
    $region11: #{tpu_custom_call.1} parent=1 // pred_check_branch
      %37 = sbr.rel (0) target = $region13
    $region12: #{tpu_custom_call.1} parent=1 // pred_region
      %38 = dma.done [#allocation4], 128
    $region13: #{tpu_custom_call.1} parent=1 // pred_fallthru
      _
    %s39 = sadd.s32 0, 0
    %p40 = scmp.lt.s32.totalorder %s39, 0
    %s41 = scalar_select %p40, %s39, 0
    %p42 = scmp.lt.s32.totalorder %s41, 0
    %s43 = scalar_select %p42, %s41, 0
    %s44 = smul.addr %s43, 2
    %s45 = scalar_lea.vmem %s1, %s44
    %s46 = sadd.s32 0, 0
    %p47 = scmp.lt.s32.totalorder %s46, 0
    %s48 = scalar_select %p47, %s46, 0
    %s49 = sadd.s32 0, 0
    %p50 = scmp.lt.s32.totalorder %s49, 0
    %s51 = scalar_select %p50, %s49, 0
    %p52 = scmp.lt.s32.totalorder %s51, 0
    %s53 = scalar_select %p52, %s51, 0
    %s54 = smul.addr %s53, 2
    %s55 = scalar_lea.vmem %s1, %s54
    %s56 = sadd.s32 0, 0
    %p57 = scmp.lt.s32.totalorder %s56, 0
    %s58 = scalar_select %p57, %s56, 0
    %s59 = sadd.s32 0, 0
    %p60 = scmp.eq.s32.totalorder 0, 0
    // Predicated region
    $region14: #{tpu_custom_call.1} parent=1 // pred_check
      %p61 = pneg %p60
    $region15: #{tpu_custom_call.1} parent=1 // pred_check_branch
      %63 = sbr.rel (%p61) target = $region17
    $region16: #{tpu_custom_call.1} parent=1 // pred_region
      %vm64 = vcmask 122880
      %65 = vst.msk [vmem:[#allocation2] sm:$0x1] %vm64, 0.0
    $region17: #{tpu_custom_call.1} parent=1 // pred_fallthru
      _
    %p66 = scmp.lt.s32.totalorder %s59, 1
    // Predicated region
    $region18: #{tpu_custom_call.1} parent=1 // pred_check
      %p67 = pneg %p66
    $region19: #{tpu_custom_call.1} parent=1 // pred_check_branch
      %69 = sbr.rel (%p67) target = $region21
    $region20: #{tpu_custom_call.1} parent=1 // pred_region
      %v70 = vld [vmem:[#allocation3] sm:$0xff]
      %v71 = vld [vmem:[%s55] sm:$0x3]
      %v72 = vunpack.c.0.s8 %v71
      %v73 = vlaneseq
      %v74 = vand.u32 %v73, 127
      %75 = vset.pattern.permute.xlu0 0
      %76 = vperm.xlu0 %75, %v72
      %v77 = vpop.permute.xlu0 %76
      %vm78 = vcmp.eq.s32.totalorder %v74, %v77
      %v79 = vsel %vm78, %v70, 0.0
      %v80 = vld [vmem:[#allocation2] sm:$0x1]
      %vm81 = vcmask 130048
      %v82 = vsel %vm81, %v79, 0.0
      %v83 = vrot.slane %v82, 4
      %v84 = vadd.f32 %v82, %v83
      %v85 = vrot.slane %v84, 2
      %v86 = vadd.f32 %v84, %v85
      %v87 = vrot.slane %v86, 1
      %v88 = vadd.f32 %v86, %v87
      %v89 = vadd.f32 %v80, %v88
      %vm90 = vcmask 122880
      %91 = vst.msk [vmem:[#allocation2] sm:$0x1] %vm90, %v89
    $region21: #{tpu_custom_call.1} parent=1 // pred_fallthru
      _
    // Predicated region
    $region22: #{tpu_custom_call.1} parent=1 // pred_check
      %p92 = pneg %p60
    $region23: #{tpu_custom_call.1} parent=1 // pred_check_branch
      %94 = sbr.rel (%p92) target = $region25
    $region24: #{tpu_custom_call.1} parent=1 // pred_region
      %v95 = vld [vmem:[#allocation2] sm:$0x1]
      %vm96 = vcmask 122880
      %v97 = vsel %vm96, %v95, 0.0
      %98 = vadd.xlane.f32.xlu0 %v97
      %v99 = vpop.xlane.xlu0 %98
      %v100 = vrot.slane %v99, 4
      %v101 = vadd.f32 %v99, %v100
      %v102 = vrot.slane %v101, 2
      %v103 = vadd.f32 %v101, %v102
      %v104 = vrot.slane %v103, 1
      %v105 = vadd.f32 %v103, %v104
      %s106 = vtos %v105
      %s107 = ssub.f32 0.0, %s106
      %s108 = smul.f32 %s107, 0.125
      %v109 = vstv %s108
      %v110 = vadd.f32 %v109, 0.0
      %111 = vst [vmem:[#allocation6] sm:$0xff] %v110
    $region25: #{tpu_custom_call.1} parent=1 // pred_fallthru
      _
    // Predicated region
    $region26: #{tpu_custom_call.1} parent=1 // pred_check
      _
    $region27: #{tpu_custom_call.1} parent=1 // pred_check_branch
      %113 = sbr.rel (0) target = $region29
    $region28: #{tpu_custom_call.1} parent=1 // pred_region
      %s115 = ssub.s32 128, 128
      %116 = vsyncadd [#allocation5], %s115
      %s118 = sshll.u32 [#allocation6], 4
      %s119 = int_to_ptr.vmem [resolvable:$true] %s118
      %121 = dma.vmem_to_hbm [thread:$0]  %s119, 128, %s2, [#allocation5]
    $region29: #{tpu_custom_call.1} parent=1 // pred_fallthru
      _
    // Predicated region
    $region30: #{tpu_custom_call.1} parent=1 // pred_check
      _
    $region31: #{tpu_custom_call.1} parent=1 // pred_check_branch
      %123 = sbr.rel (0) target = $region33
    $region32: #{tpu_custom_call.1} parent=1 // pred_region
      %124 = dma.done [#allocation5], 128
    $region33: #{tpu_custom_call.1} parent=1 // pred_fallthru
      _
    %125 = vsyncpa [#allocation4], 1
    %126 = vsyncpa [#allocation5], 1

</llo_original>
